<compile_context>
chip_gen: v7x
topology: tpu7x:2x2x1
jax: 0.10.0
libtpu: 0.0.40
codegen_flags: <defaults>
</compile_context>

<pallas_src>
import functools

import jax
import jax.numpy as jnp
from jax.experimental import pallas as pl
from jax.experimental.pallas import tpu as pltpu


def spatial_attn_kernel(x_ref, w_ref, b_ref, o_ref, *, batch, channels):
    # x_ref / o_ref: (batch*channels, s_tile) row-major view of the NCS tensor
    # w_ref: (H, C) fc weight (f32);  b_ref: (H, 1) fc bias (f32);  H == C
    w = w_ref[...]
    bias = b_ref[...]                                   # (H, 1) -> broadcasts over s

    # logits[b] = w @ x[b] + bias : `batch` clean 2-D matmuls (f32 MXU accum),
    # no weight broadcast, no batched dot_general.
    logits = []
    for bi in range(batch):
        xb = x_ref[pl.ds(bi * channels, channels), :]   # (C, s_tile), native dtype
        logits.append(jnp.dot(w, xb, preferred_element_type=jnp.float32) + bias)

    # F.softmax with implicit dim on a 3-D tensor -> softmax over dim 0 (batch),
    # reproducing the module's legacy-default behavior (f32 stats).
    m = logits[0]
    for bi in range(1, batch):
        m = jnp.maximum(m, logits[bi])
    exps = [jnp.exp(l - m) for l in logits]
    denom = exps[0]
    for bi in range(1, batch):
        denom = denom + exps[bi]

    # EUP approx reciprocal (free slot next to the exps) + one Newton step on
    # the small (C, s) tensor restores full f32 accuracy (denom >= 1 always).
    inv = pl.reciprocal(denom, approx=True)
    inv = inv * (2.0 - denom * inv)

    # Elementwise product in f32 (matches the reference for low-precision x),
    # single downcast at the lane-dense store.
    for bi in range(batch):
        xb = x_ref[pl.ds(bi * channels, channels), :].astype(jnp.float32)
        o_ref[pl.ds(bi * channels, channels), :] = (
            xb * (exps[bi] * inv)).astype(o_ref.dtype)


def _tpu_vmem_params():
    """(vmem_budget_bytes, vmem_limit_bytes, min_grid_steps) per TPU generation."""
    cap = 64 * 1024 * 1024  # conservative fallback (v7x per-TC physical VMEM)
    try:
        cap = int(pltpu.get_tpu_info().vmem_capacity_bytes)
    except Exception:
        pass
    if cap >= 96 * 1024 * 1024:
        # v5e / v6e (and other 128-MiB parts): single TensorCore, big tiles pay.
        return 88 * 1024 * 1024, 100 * 1024 * 1024, 2
    # v7x: 64 MiB physical per TC, 2 TensorCores -> want >=2 steps per core,
    # and headroom for compiler-internal scratch below the physical limit.
    return 36 * 1024 * 1024, 46 * 1024 * 1024, 4


def _pick_s_tile(B, C, S, itemsize, budget, min_steps):
    """Largest lane-aligned spatial tile fitting the VMEM budget while keeping
    at least `min_steps` grid steps (pipelining; both TCs on v7x). Accounts for
    sublane padding of the I/O blocks and the f32 temporaries."""
    if S <= 128:
        return S                          # single full block (block == full dims)
    rows = B * C
    pack = max(8, 32 // max(1, itemsize))            # sublane packing of I/O dtype
    rows_pad = pl.cdiv(rows, pack) * pack            # padded rows of the I/O tiles
    c_pad_f32 = pl.cdiv(C, 8) * 8                    # padded rows of f32 temps
    # bytes per unit of s in VMEM:
    #   input + output blocks (double buffered, native dtype, sublane padded)
    #   + B x (logits, exp, f32 product) + (max, denom, inv) temporaries (f32)
    per_s = (2 * 2 * rows_pad * itemsize
             + (3 * B + 3) * c_pad_f32 * 4)
    max_tile = max(128, (budget // per_s) // 128 * 128)
    # lane-aligned, no larger than (padded) S, and >= min_steps grid steps
    s_cap_steps = max(128, pl.cdiv(pl.cdiv(S, min_steps), 128) * 128)
    return min(max_tile, pl.cdiv(S, 128) * 128, s_cap_steps)


def spatial_attn(x_ncs, w, b, *, s_tile=None):
    """x_ncs: (B, C, S); w: (H, C); b: (H,). Returns (B, C, S). No layout copies
    (the (B*C, S) presentation is a free row-major view of a contiguous array)."""
    B, C, S = x_ncs.shape
    H = w.shape[0]
    assert H == C, "SpatialAttn's elementwise product requires hidden == channel"

    budget, vmem_limit, min_steps = _tpu_vmem_params()
    if s_tile is None:
        s_tile = _pick_s_tile(B, C, S, jnp.dtype(x_ncs.dtype).itemsize,
                              budget, min_steps)

    rows = B * C
    x2d = x_ncs.reshape(rows, S)                 # free view; sublane-dense tiles
    wf = w.astype(jnp.float32)
    b2 = b.reshape(H, 1).astype(jnp.float32)     # bias broadcasts along S (lanes)

    out2d = pl.pallas_call(
        functools.partial(spatial_attn_kernel, batch=B, channels=C),
        out_shape=jax.ShapeDtypeStruct((rows, S), x_ncs.dtype),
        grid_spec=pltpu.PrefetchScalarGridSpec(
            num_scalar_prefetch=0,
            grid=(pl.cdiv(S, s_tile),),
            in_specs=[
                # full batch*channels per block (softmax reduces over B, the fc
                # contracts over C); only S is tiled (ragged last block OK).
                pl.BlockSpec((rows, s_tile), lambda s: (0, s)),
                pl.BlockSpec((H, C), lambda s: (0, 0)),
                pl.BlockSpec((H, 1), lambda s: (0, 0)),
            ],
            out_specs=pl.BlockSpec((rows, s_tile), lambda s: (0, s)),
        ),
        compiler_params=pltpu.CompilerParams(
            dimension_semantics=("parallel",),
            vmem_limit_bytes=vmem_limit,
        ),
    )(x2d, wf, b2)
    return out2d.reshape(B, C, S)


def spatial_attn_ref(x_ncs, w, b):
    x = jnp.transpose(x_ncs, (0, 2, 1)).astype(jnp.float32)      # (B, S, C)
    logits = x @ w.astype(jnp.float32).T + b.astype(jnp.float32)
    attn = jax.nn.softmax(logits, axis=0)   # dim=0, matching legacy F.softmax
    return jnp.transpose(x * attn, (0, 2, 1)).astype(x_ncs.dtype)


def _run_case(key, B, C, S):
    H = C  # hidden_size must equal channel_size for the module to broadcast
    kx, kw, kb = jax.random.split(key, 3)
    x = jax.random.normal(kx, (B, C, S), dtype=jnp.float32)
    # nn.Linear default init: U(-1/sqrt(C), 1/sqrt(C)), deterministic here
    bound = 1.0 / jnp.sqrt(jnp.float32(C))
    w = jax.random.uniform(kw, (H, C), jnp.float32, -bound, bound)
    b = jax.random.uniform(kb, (H,), jnp.float32, -bound, bound)

    out = jax.block_until_ready(spatial_attn(x, w, b))
    ref = spatial_attn_ref(x, w, b)
    assert out.shape == (B, C, S)
    assert jnp.allclose(out, ref, atol=1e-5, rtol=1e-5)


if __name__ == "__main__":
    key = jax.random.PRNGKey(0)
    k1, k2, k3 = jax.random.split(key, 3)

    # small shape matching the module spec
    _run_case(k1, B=2, C=4, S=16)
    # larger shape exercising the lane-aligned multi-step (pipelined) grid
    _run_case(k2, B=2, C=8, S=512)
    # irregular spatial extent exercising the ragged (masked) last block
    _run_case(k3, B=2, C=4, S=300)

    print("KERNEL_OK")
</pallas_src>

<mosaic_0001>
module attributes {stable_mosaic.version = 11 : i64} {
  func.func @spatial_attn_kernel(%arg0: i32, %arg1: memref<8x16xf32, #tpu.memory_space<vmem>>, %arg2: memref<4x4xf32, #tpu.memory_space<vmem>>, %arg3: memref<4x1xf32, #tpu.memory_space<vmem>>, %arg4: memref<8x16xf32, #tpu.memory_space<vmem>>) attributes {dimension_semantics = [#tpu.dimension_semantics<parallel>], iteration_bounds = array<i64: 1>, scalar_prefetch = 0 : i64, scratch_operands = 0 : i64, tpu.core_type = #tpu.core_type<tc>, window_params = [{transform_indices = @transform_0, window_bounds = array<i64: 8, 16>}, {pipeline_mode = #tpu.pipeline_mode<synchronous>, transform_indices = @transform_1, window_bounds = array<i64: 4, 4>}, {pipeline_mode = #tpu.pipeline_mode<synchronous>, transform_indices = @transform_2, window_bounds = array<i64: 4, 1>}, {transform_indices = @transform_3, window_bounds = array<i64: 8, 16>}]} {
    %c0 = arith.constant 0 : index
    %c0_0 = arith.constant 0 : index
    %0 = vector.load %arg2[%c0, %c0_0] : memref<4x4xf32, #tpu.memory_space<vmem>>, vector<4x4xf32>
    %c0_1 = arith.constant 0 : index
    %c0_2 = arith.constant 0 : index
    %1 = vector.load %arg3[%c0_1, %c0_2] : memref<4x1xf32, #tpu.memory_space<vmem>>, vector<4x1xf32>
    %c0_3 = arith.constant 0 : index
    %c0_4 = arith.constant 0 : index
    %2 = vector.load %arg1[%c0_3, %c0_4] : memref<8x16xf32, #tpu.memory_space<vmem>>, vector<4x16xf32>
    %cst = arith.constant dense<0.000000e+00> : vector<4x16xf32>
    %3 = tpu.matmul %0, %2, %cst {dimension_numbers = #tpu.dot_dimension_numbers<[1], [0], [0], [1], [0, 0, 1, 1], [], []>} : vector<4x4xf32>, vector<4x16xf32>, vector<4x16xf32> -> vector<4x16xf32>
    %4 = vector.broadcast %1 : vector<4x1xf32> to vector<4x16xf32>
    %5 = arith.addf %3, %4 : vector<4x16xf32>
    %c4 = arith.constant 4 : index
    %c0_5 = arith.constant 0 : index
    %6 = vector.load %arg1[%c4, %c0_5] : memref<8x16xf32, #tpu.memory_space<vmem>>, vector<4x16xf32>
    %cst_6 = arith.constant dense<0.000000e+00> : vector<4x16xf32>
    %7 = tpu.matmul %0, %6, %cst_6 {dimension_numbers = #tpu.dot_dimension_numbers<[1], [0], [0], [1], [0, 0, 1, 1], [], []>} : vector<4x4xf32>, vector<4x16xf32>, vector<4x16xf32> -> vector<4x16xf32>
    %8 = vector.broadcast %1 : vector<4x1xf32> to vector<4x16xf32>
    %9 = arith.addf %7, %8 : vector<4x16xf32>
    %10 = arith.maximumf %5, %9 : vector<4x16xf32>
    %11 = arith.subf %5, %10 : vector<4x16xf32>
    %12 = math.exp %11 : vector<4x16xf32>
    %13 = arith.subf %9, %10 : vector<4x16xf32>
    %14 = math.exp %13 : vector<4x16xf32>
    %15 = arith.addf %12, %14 : vector<4x16xf32>
    %16 = tpu.reciprocal %15 {approx = true} : vector<4x16xf32> -> vector<4x16xf32>
    %17 = arith.mulf %15, %16 : vector<4x16xf32>
    %cst_7 = arith.constant 2.000000e+00 : f32
    %18 = vector.broadcast %cst_7 : f32 to vector<4x16xf32>
    %19 = arith.subf %18, %17 : vector<4x16xf32>
    %20 = arith.mulf %16, %19 : vector<4x16xf32>
    %c0_8 = arith.constant 0 : index
    %c0_9 = arith.constant 0 : index
    %21 = vector.load %arg1[%c0_8, %c0_9] : memref<8x16xf32, #tpu.memory_space<vmem>>, vector<4x16xf32>
    %22 = arith.mulf %12, %20 : vector<4x16xf32>
    %23 = arith.mulf %21, %22 : vector<4x16xf32>
    %c0_10 = arith.constant 0 : index
    %c0_11 = arith.constant 0 : index
    %24 = vector.load %arg4[%c0_10, %c0_11] : memref<8x16xf32, #tpu.memory_space<vmem>>, vector<4x16xf32>
    tpu.vector_store %arg4[%c0_10, %c0_11], %23 {strides = array<i32>} : memref<8x16xf32, #tpu.memory_space<vmem>>, vector<4x16xf32>,
    %c4_12 = arith.constant 4 : index
    %c0_13 = arith.constant 0 : index
    %25 = vector.load %arg1[%c4_12, %c0_13] : memref<8x16xf32, #tpu.memory_space<vmem>>, vector<4x16xf32>
    %26 = arith.mulf %14, %20 : vector<4x16xf32>
    %27 = arith.mulf %25, %26 : vector<4x16xf32>
    %c4_14 = arith.constant 4 : index
    %c0_15 = arith.constant 0 : index
    %28 = vector.load %arg4[%c4_14, %c0_15] : memref<8x16xf32, #tpu.memory_space<vmem>>, vector<4x16xf32>
    tpu.vector_store %arg4[%c4_14, %c0_15], %27 {strides = array<i32>} : memref<8x16xf32, #tpu.memory_space<vmem>>, vector<4x16xf32>,
    return
  }
  func.func @transform_0(%arg0: i32) -> (i32, i32) {
    %c0_i32 = arith.constant 0 : i32
    %c0_i32_0 = arith.constant 0 : i32
    return %c0_i32, %arg0 : i32, i32
  }
  func.func @transform_1(%arg0: i32) -> (i32, i32) {
    %c0_i32 = arith.constant 0 : i32
    %c0_i32_0 = arith.constant 0 : i32
    %c0_i32_1 = arith.constant 0 : i32
    return %c0_i32, %c0_i32_0 : i32, i32
  }
  func.func @transform_2(%arg0: i32) -> (i32, i32) {
    %c0_i32 = arith.constant 0 : i32
    %c0_i32_0 = arith.constant 0 : i32
    %c0_i32_1 = arith.constant 0 : i32
    return %c0_i32, %c0_i32_0 : i32, i32
  }
  func.func @transform_3(%arg0: i32) -> (i32, i32) {
    %c0_i32 = arith.constant 0 : i32
    %c0_i32_0 = arith.constant 0 : i32
    return %c0_i32, %arg0 : i32, i32
  }
}

</mosaic_0001>

<llo_original>
// kernel: tpu_custom_call.1
$region0: #{tpu_custom_call.1}
  #allocation0 [shape = 'u32[]', space=smem, size = 0x4, offset = 0x4, fixed_abs, tag = 'smem constant byte address 0x4 - core index']
  #allocation1 [shape = 'u32[144,128]{1,0:T(1,128)}', space=vmem, size = 0x12000, scoped, tag = 'internal scratch']
  %s0 = inlined_call_operand.hbm [shape: f32[8,16], index: 0, kind: input, shape index: {}]
  %s1 = inlined_call_operand.vmem [shape: f32[4,4], index: 1, kind: input, shape index: {}]
  %s2 = inlined_call_operand.vmem [shape: f32[4,1], index: 2, kind: input, shape index: {}]
  %s3 = inlined_call_operand.hbm [shape: f32[8,16], index: 3, kind: output, shape index: {}]
  %s4 = sld [smem:[#allocation0]]
  $region26: #{tpu_custom_call.1} parent=0
    _
  %s6 = ssub.s32 1, %s4
  %s7 = scalar_select 0, %s6, %s4
  $region1: #{tpu_custom_call.1} parent=0
    #allocation2 [shape = 'u8[4096]{0}', space=vmem, size = 0x1000, scoped, tag = 'input window, operand 0, single buffered']
    #allocation3 [shape = 's32[1]{0}', space=sflag, size = 0x4, scoped, tag = 'scoped memory for tpu_custom_call.1']
    #allocation4 [shape = 's32[1]{0}', space=sflag, size = 0x4, scoped, tag = 'scoped memory for tpu_custom_call.1']
    #allocation5 [shape = 'u8[4096]{0}', space=vmem, size = 0x1000, scoped, tag = 'output window, operand 0, single buffered']
    %8 = vsyncpa [#allocation3], 0
    %9 = vsyncpa [#allocation4], 0
    // Predicated region
    $region2: #{tpu_custom_call.1} parent=1 // pred_check
      _
    $region3: #{tpu_custom_call.1} parent=1 // pred_check_branch
      %11 = sbr.rel (0) target = $region5
    $region4: #{tpu_custom_call.1} parent=1 // pred_region
      %s13 = ssub.s32 128, 128
      %14 = vsyncadd [#allocation3], %s13
      %s16 = sshll.u32 [#allocation2], 4
      %s17 = int_to_ptr.vmem [resolvable:$true] %s16
      %19 = dma.hbm_to_vmem [thread:$0]  %s0, 128, %s17, [#allocation3]
    $region5: #{tpu_custom_call.1} parent=1 // pred_fallthru
      _
    // Predicated region
    $region6: #{tpu_custom_call.1} parent=1 // pred_check
      _
    $region7: #{tpu_custom_call.1} parent=1 // pred_check_branch
      %21 = sbr.rel (0) target = $region9
    $region8: #{tpu_custom_call.1} parent=1 // pred_region
      _
    $region9: #{tpu_custom_call.1} parent=1 // pred_fallthru
      _
    // Predicated region
    $region10: #{tpu_custom_call.1} parent=1 // pred_check
      _
    $region11: #{tpu_custom_call.1} parent=1 // pred_check_branch
      %23 = sbr.rel (0) target = $region13
    $region12: #{tpu_custom_call.1} parent=1 // pred_region
      _
    $region13: #{tpu_custom_call.1} parent=1 // pred_fallthru
      _
    // Predicated region
    $region14: #{tpu_custom_call.1} parent=1 // pred_check
      _
    $region15: #{tpu_custom_call.1} parent=1 // pred_check_branch
      %25 = sbr.rel (0) target = $region17
    $region16: #{tpu_custom_call.1} parent=1 // pred_region
      %26 = dma.done [#allocation3], 128
    $region17: #{tpu_custom_call.1} parent=1 // pred_fallthru
      _
    %v27 = vld [vmem:[%s1] sm:$0xf]
    %v28 = vld [vmem:[%s2] sm:$0xf]
    %v29 = vld [vmem:[#allocation2] sm:$0xf]
    %31 = vset.pattern.permute.xlu0 0
    %32 = vperm.xlu0 %31, %v28
    %v33 = vpop.permute.xlu0 %32
    %vm35 = vcmask 31744
    %v37 = vsel %vm35, %v27, 0
    %vm39 = vcmask 1043456
    %v41 = vsel %vm39, %v29, 0
    %43 = vmatprep.subr.mxu0 0.0
    %44 = vmatpush1.msra.mxu0 %v41
    %45 = vmatprep.subr.mxu0 0.0
    %46 = vmatpush1.msra.mxu0 0.0
    %47 = vmatprep.subr.mxu0 0.0
    %48 = vmatpush1.msra.mxu0 0.0
    %49 = vmatprep.subr.mxu0 0.0
    %50 = vmatpush1.msra.mxu0 0.0
    %51 = vmatprep.subr.mxu0 0.0
    %52 = vmatpush1.msra.mxu0 0.0
    %53 = vmatprep.subr.mxu0 0.0
    %54 = vmatpush1.msra.mxu0 0.0
    %55 = vmatprep.subr.mxu0 0.0
    %56 = vmatpush1.msra.mxu0 0.0
    %57 = vmatprep.subr.mxu0 0.0
    %58 = vmatpush1.msra.mxu0 0.0
    %59 = vmatprep.subr.mxu0 0.0
    %60 = vmatpush1.msra.mxu0 0.0
    %61 = vmatprep.subr.mxu0 0.0
    %62 = vmatpush1.msra.mxu0 0.0
    %63 = vmatprep.subr.mxu0 0.0
    %64 = vmatpush1.msra.mxu0 0.0
    %65 = vmatprep.subr.mxu0 0.0
    %66 = vmatpush1.msra.mxu0 0.0
    %67 = vmatprep.subr.mxu0 0.0
    %68 = vmatpush1.msra.mxu0 0.0
    %69 = vmatprep.subr.mxu0 0.0
    %70 = vmatpush1.msra.mxu0 0.0
    %71 = vmatprep.subr.mxu0 0.0
    %72 = vmatpush1.msra.mxu0 0.0
    %73 = vmatprep.subr.mxu0 0.0
    %74 = vmatpush1.msra.mxu0 0.0
    %75 = vmatprep.subr.mxu0 0.0
    %76 = vmatpush1.msra.mxu0 0.0
    %77 = vmatprep.subr.mxu0 0.0
    %78 = vmatpush1.msra.mxu0 0.0
    %79 = vmatprep.subr.mxu0 0.0
    %80 = vmatpush1.msra.mxu0 0.0
    %81 = vmatprep.subr.mxu0 0.0
    %82 = vmatpush1.msra.mxu0 0.0
    %83 = vmatprep.subr.mxu0 0.0
    %84 = vmatpush1.msra.mxu0 0.0
    %85 = vmatprep.subr.mxu0 0.0
    %86 = vmatpush1.msra.mxu0 0.0
    %87 = vmatprep.subr.mxu0 0.0
    %88 = vmatpush1.msra.mxu0 0.0
    %89 = vmatprep.subr.mxu0 0.0
    %90 = vmatpush1.msra.mxu0 0.0
    %91 = vmatprep.subr.mxu0 0.0
    %92 = vmatpush1.msra.mxu0 0.0
    %93 = vmatprep.subr.mxu0 0.0
    %94 = vmatpush1.msra.mxu0 0.0
    %95 = vmatprep.subr.mxu0 0.0
    %96 = vmatpush1.msra.mxu0 0.0
    %97 = vmatprep.subr.mxu0 0.0
    %98 = vmatpush1.msra.mxu0 0.0
    %99 = vmatprep.subr.mxu0 0.0
    %100 = vmatpush1.msra.mxu0 0.0
    %101 = vmatprep.subr.mxu0 0.0
    %102 = vmatpush1.msra.mxu0 0.0
    %103 = vmatprep.subr.mxu0 0.0
    %104 = vmatpush1.msra.mxu0 0.0
    %105 = vmatprep.subr.mxu0 0.0
    %106 = vmatpush1.msra.mxu0 0.0
    %107 = vmatprep.mubr.f32.mxu0 0.0
    %108 = vmatmul.mubr.f32.gmra.mrb[0].mxu0 %v37
    %v109 = vpop.f32.mrb[0].mxu0
    %v110 = vadd.f32 %v33, %v109
    %v111 = vpop.f32.mrb[0].mxu0
    %112 = vdwg.mxu0
    %v113 = vld [vmem:[#allocation2 + $0x4] sm:$0xf]
    %v115 = vsel %vm39, %v113, 0
    %117 = vmatprep.subr.mxu0 0.0
    %118 = vmatpush1.msra.mxu0 %v115
    %119 = vmatprep.subr.mxu0 0.0
    %120 = vmatpush1.msra.mxu0 0.0
    %121 = vmatprep.subr.mxu0 0.0
    %122 = vmatpush1.msra.mxu0 0.0
    %123 = vmatprep.subr.mxu0 0.0
    %124 = vmatpush1.msra.mxu0 0.0
    %125 = vmatprep.subr.mxu0 0.0
    %126 = vmatpush1.msra.mxu0 0.0
    %127 = vmatprep.subr.mxu0 0.0
    %128 = vmatpush1.msra.mxu0 0.0
    %129 = vmatprep.subr.mxu0 0.0
    %130 = vmatpush1.msra.mxu0 0.0
    %131 = vmatprep.subr.mxu0 0.0
    %132 = vmatpush1.msra.mxu0 0.0
    %133 = vmatprep.subr.mxu0 0.0
    %134 = vmatpush1.msra.mxu0 0.0
    %135 = vmatprep.subr.mxu0 0.0
    %136 = vmatpush1.msra.mxu0 0.0
    %137 = vmatprep.subr.mxu0 0.0
    %138 = vmatpush1.msra.mxu0 0.0
    %139 = vmatprep.subr.mxu0 0.0
    %140 = vmatpush1.msra.mxu0 0.0
    %141 = vmatprep.subr.mxu0 0.0
    %142 = vmatpush1.msra.mxu0 0.0
    %143 = vmatprep.subr.mxu0 0.0
    %144 = vmatpush1.msra.mxu0 0.0
    %145 = vmatprep.subr.mxu0 0.0
    %146 = vmatpush1.msra.mxu0 0.0
    %147 = vmatprep.subr.mxu0 0.0
    %148 = vmatpush1.msra.mxu0 0.0
    %149 = vmatprep.subr.mxu0 0.0
    %150 = vmatpush1.msra.mxu0 0.0
    %151 = vmatprep.subr.mxu0 0.0
    %152 = vmatpush1.msra.mxu0 0.0
    %153 = vmatprep.subr.mxu0 0.0
    %154 = vmatpush1.msra.mxu0 0.0
    %155 = vmatprep.subr.mxu0 0.0
    %156 = vmatpush1.msra.mxu0 0.0
    %157 = vmatprep.subr.mxu0 0.0
    %158 = vmatpush1.msra.mxu0 0.0
    %159 = vmatprep.subr.mxu0 0.0
    %160 = vmatpush1.msra.mxu0 0.0
    %161 = vmatprep.subr.mxu0 0.0
    %162 = vmatpush1.msra.mxu0 0.0
    %163 = vmatprep.subr.mxu0 0.0
    %164 = vmatpush1.msra.mxu0 0.0
    %165 = vmatprep.subr.mxu0 0.0
    %166 = vmatpush1.msra.mxu0 0.0
    %167 = vmatprep.subr.mxu0 0.0
    %168 = vmatpush1.msra.mxu0 0.0
    %169 = vmatprep.subr.mxu0 0.0
    %170 = vmatpush1.msra.mxu0 0.0
    %171 = vmatprep.subr.mxu0 0.0
    %172 = vmatpush1.msra.mxu0 0.0
    %173 = vmatprep.subr.mxu0 0.0
    %174 = vmatpush1.msra.mxu0 0.0
    %175 = vmatprep.subr.mxu0 0.0
    %176 = vmatpush1.msra.mxu0 0.0
    %177 = vmatprep.subr.mxu0 0.0
    %178 = vmatpush1.msra.mxu0 0.0
    %179 = vmatprep.subr.mxu0 0.0
    %180 = vmatpush1.msra.mxu0 0.0
    %181 = vmatprep.mubr.f32.mxu0 0.0
    %182 = vmatmul.mubr.f32.gmra.mrb[0].mxu0 %v37
    %v183 = vpop.f32.mrb[0].mxu0
    %v184 = vadd.f32 %v33, %v183
    %v185 = vpop.f32.mrb[0].mxu0
    %186 = vdwg.mxu0
    %v187 = vmax.f32 %v110, %v184
    %v188 = vsub.f32 %v110, %v187
    %v189 = vmul.f32 %v188, 1.442695
    %v190 = vpow.pop %v189
    %v191 = vsub.f32 %v184, %v187
    %v192 = vmul.f32 %v191, 1.442695
    %v193 = vpow.pop %v192
    %v194 = vadd.f32 %v190, %v193
    %v195 = vrcp.pop %v194
    %v196 = vmul.f32 %v194, %v195
    %v197 = vsub.f32 2.0, %v196
    %v198 = vmul.f32 %v195, %v197
    %v199 = vmul.f32 %v190, %v198
    %v200 = vmul.f32 %v29, %v199
    %vm201 = vcmask 125952
    %202 = vst.msk [vmem:[#allocation5] sm:$0xf] %vm201, %v200
    %v203 = vld [vmem:[#allocation2 + $0x4] sm:$0xf]
    %v204 = vmul.f32 %v193, %v198
    %v205 = vmul.f32 %v203, %v204
    %206 = vst.msk [vmem:[#allocation5 + $0x4] sm:$0xf] %vm201, %v205
    // Predicated region
    $region18: #{tpu_custom_call.1} parent=1 // pred_check
      _
    $region19: #{tpu_custom_call.1} parent=1 // pred_check_branch
      %208 = sbr.rel (0) target = $region21
    $region20: #{tpu_custom_call.1} parent=1 // pred_region
      %s210 = ssub.s32 128, 128
      %211 = vsyncadd [#allocation4], %s210
      %s213 = sshll.u32 [#allocation5], 4
      %s214 = int_to_ptr.vmem [resolvable:$true] %s213
      %216 = dma.vmem_to_hbm [thread:$0]  %s214, 128, %s3, [#allocation4]
    $region21: #{tpu_custom_call.1} parent=1 // pred_fallthru
      _
    // Predicated region
    $region22: #{tpu_custom_call.1} parent=1 // pred_check
      _
    $region23: #{tpu_custom_call.1} parent=1 // pred_check_branch
      %218 = sbr.rel (0) target = $region25
    $region24: #{tpu_custom_call.1} parent=1 // pred_region
      %219 = dma.done [#allocation4], 128
    $region25: #{tpu_custom_call.1} parent=1 // pred_fallthru
      _
    %220 = vsyncpa [#allocation3], 1
    %221 = vsyncpa [#allocation4], 1

</llo_original>
